<compile_context>
chip_gen: v5e
topology: v5e:2x2
jax: 0.10.0
libtpu: 0.0.40
codegen_flags: <defaults>
</compile_context>

<pallas_src>
import jax
import jax.numpy as jnp
from jax.experimental import pallas as pl
from jax.experimental.pallas import tpu as pltpu


def mlp_kernel(x_ref, w1_ref, b1_ref, w2t_ref, b2_ref, ot_ref):
    # First linear: (TB, 10) @ (10, 16) + (1, 16), then ReLU.
    h = jnp.dot(x_ref[...], w1_ref[...], preferred_element_type=jnp.float32)
    h = jnp.maximum(h + b1_ref[...], 0.0)
    # Second linear, transposed output (lane-dense along the batch):
    #   out^T[o, b] = sum_k w2t[o, k] * h[b, k]    -> (2, TB)
    out_t = jax.lax.dot_general(
        w2t_ref[...], h,
        dimension_numbers=(((1,), (1,)), ((), ())),
        preferred_element_type=jnp.float32,
    )
    out_t = out_t + b2_ref[...]  # b2 is (2, 1): broadcast over batch lanes.
    ot_ref[...] = out_t.astype(ot_ref.dtype)


def foo_forward(x, w1, b1, w2t, b2, *, tb_max=8192):
    """Forward pass of Foo.

    x: (B, 10) f32, w1: (10, 16), b1: (1, 16), w2t: (2, 16), b2: (2, 1).
    Returns (B, 2) f32 (matches the PyTorch module).
    """
    B, d_in = x.shape
    d_hid = w1.shape[1]
    d_out = w2t.shape[0]

    if B <= tb_max:
        # Single block covering the whole batch: block dims equal the array
        # dims, so there is no (8, 128) alignment constraint and no padding.
        tb = B
    else:
        # Row tile must be a multiple of 8 (x sublanes) and 128 (out^T lanes).
        tb = max(128, (tb_max // 128) * 128)

    grid = (pl.cdiv(B, tb),)

    # Advisory cost hint for XLA's scheduler (mem-bound, tiny FLOPs).
    flops = 2 * B * (d_in * d_hid + d_hid * d_out)
    bytes_accessed = 4 * (
        B * d_in + B * d_out + w1.size + b1.size + w2t.size + b2.size
    )

    out_t = pl.pallas_call(
        mlp_kernel,
        out_shape=jax.ShapeDtypeStruct((d_out, B), jnp.float32),
        grid=grid,
        in_specs=[
            # Batch-tiled activation stream (double-buffered by the pipeline).
            # If profiling ever shows the x DMA exposed, add
            # pipeline_mode=pl.Buffered(3) here.
            pl.BlockSpec((tb, d_in), lambda i: (i, 0)),
            # Weights / biases: constant block index -> VMEM-resident.
            pl.BlockSpec(w1.shape, lambda i: (0, 0)),
            pl.BlockSpec(b1.shape, lambda i: (0, 0)),
            pl.BlockSpec(w2t.shape, lambda i: (0, 0)),
            pl.BlockSpec(b2.shape, lambda i: (0, 0)),
        ],
        # Lane-dense output: batch on the 128-lane axis -> unmasked stores and
        # contiguous HBM writeback runs.
        out_specs=pl.BlockSpec((d_out, tb), lambda i: (0, i)),
        compiler_params=pltpu.CompilerParams(
            dimension_semantics=("parallel",),  # megacore / v7x batch split
            vmem_limit_bytes=32 * 1024 * 1024,  # explicit headroom, all gens
        ),
        cost_estimate=pl.CostEstimate(
            flops=flops, transcendentals=0, bytes_accessed=bytes_accessed
        ),
    )(x, w1, b1, w2t, b2)

    # (2, B) -> (B, 2) to match the PyTorch module's output layout.
    return out_t.T


def init_params(key):
    # Mimic torch.nn.Linear default init: U(-1/sqrt(fan_in), 1/sqrt(fan_in)).
    k1, k2, k3, k4 = jax.random.split(key, 4)
    in1, out1 = 10, 16
    in2, out2 = 16, 2
    bound1 = 1.0 / jnp.sqrt(jnp.float32(in1))
    bound2 = 1.0 / jnp.sqrt(jnp.float32(in2))
    # w1 stored (in, out) so the kernel does x @ w1; w2 stored (out, in)
    # (PyTorch layout) so the kernel does the A @ B^T contraction directly.
    w1 = jax.random.uniform(k1, (in1, out1), jnp.float32, -bound1, bound1)
    b1 = jax.random.uniform(k2, (1, out1), jnp.float32, -bound1, bound1)
    w2t = jax.random.uniform(k3, (out2, in2), jnp.float32, -bound2, bound2)
    b2 = jax.random.uniform(k4, (out2, 1), jnp.float32, -bound2, bound2)
    return w1, b1, w2t, b2


def _reference(x, w1, b1, w2t, b2):
    return jnp.maximum(x @ w1 + b1, 0.0) @ w2t.T + b2.T


if __name__ == "__main__":
    key = jax.random.PRNGKey(0)
    pkey, xkey1, xkey2, xkey3 = jax.random.split(key, 4)
    w1, b1, w2t, b2 = init_params(pkey)

    # Small, single-block batch.
    batch = 8
    x = jax.random.normal(xkey1, (batch, 10), jnp.float32)
    out = jax.block_until_ready(foo_forward(x, w1, b1, w2t, b2))
    ref = _reference(x, w1, b1, w2t, b2)
    assert out.shape == (batch, 2)
    assert jnp.allclose(out, ref, atol=1e-5, rtol=1e-5)

    # Batch not a multiple of 8: single full-array block, no padding copy.
    batch2 = 5
    x2 = jax.random.normal(xkey2, (batch2, 10), jnp.float32)
    out2 = jax.block_until_ready(foo_forward(x2, w1, b1, w2t, b2))
    ref2 = _reference(x2, w1, b1, w2t, b2)
    assert out2.shape == (batch2, 2)
    assert jnp.allclose(out2, ref2, atol=1e-5, rtol=1e-5)

    # Multi-block grid with a ragged last block (pad-free tail path).
    batch3 = 300
    x3 = jax.random.normal(xkey3, (batch3, 10), jnp.float32)
    out3 = jax.block_until_ready(foo_forward(x3, w1, b1, w2t, b2, tb_max=128))
    ref3 = _reference(x3, w1, b1, w2t, b2)
    assert out3.shape == (batch3, 2)
    assert jnp.allclose(out3, ref3, atol=1e-5, rtol=1e-5)

    print("KERNEL_OK")
</pallas_src>

<mosaic_0001>
module attributes {stable_mosaic.version = 11 : i64} {
  func.func @mlp_kernel(%arg0: i32, %arg1: memref<8x10xf32, #tpu.memory_space<vmem>>, %arg2: memref<10x16xf32, #tpu.memory_space<vmem>>, %arg3: memref<1x16xf32, #tpu.memory_space<vmem>>, %arg4: memref<2x16xf32, #tpu.memory_space<vmem>>, %arg5: memref<2x1xf32, #tpu.memory_space<vmem>>, %arg6: memref<2x8xf32, #tpu.memory_space<vmem>>) attributes {dimension_semantics = [#tpu.dimension_semantics<parallel>], iteration_bounds = array<i64: 1>, scalar_prefetch = 0 : i64, scratch_operands = 0 : i64, tpu.core_type = #tpu.core_type<tc>, window_params = [{transform_indices = @transform_0, window_bounds = array<i64: 8, 10>}, {pipeline_mode = #tpu.pipeline_mode<synchronous>, transform_indices = @transform_1, window_bounds = array<i64: 10, 16>}, {pipeline_mode = #tpu.pipeline_mode<synchronous>, transform_indices = @transform_2, window_bounds = array<i64: 1, 16>}, {pipeline_mode = #tpu.pipeline_mode<synchronous>, transform_indices = @transform_3, window_bounds = array<i64: 2, 16>}, {pipeline_mode = #tpu.pipeline_mode<synchronous>, transform_indices = @transform_4, window_bounds = array<i64: 2, 1>}, {transform_indices = @transform_5, window_bounds = array<i64: 2, 8>}]} {
    %c0 = arith.constant 0 : index
    %c0_0 = arith.constant 0 : index
    %0 = vector.load %arg1[%c0, %c0_0] : memref<8x10xf32, #tpu.memory_space<vmem>>, vector<8x10xf32>
    %c0_1 = arith.constant 0 : index
    %c0_2 = arith.constant 0 : index
    %1 = vector.load %arg2[%c0_1, %c0_2] : memref<10x16xf32, #tpu.memory_space<vmem>>, vector<10x16xf32>
    %cst = arith.constant dense<0.000000e+00> : vector<8x16xf32>
    %2 = tpu.matmul %0, %1, %cst {dimension_numbers = #tpu.dot_dimension_numbers<[1], [0], [0], [1], [0, 0, 1, 1], [], []>} : vector<8x10xf32>, vector<10x16xf32>, vector<8x16xf32> -> vector<8x16xf32>
    %c0_3 = arith.constant 0 : index
    %c0_4 = arith.constant 0 : index
    %3 = vector.load %arg3[%c0_3, %c0_4] : memref<1x16xf32, #tpu.memory_space<vmem>>, vector<1x16xf32>
    %4 = vector.broadcast %3 : vector<1x16xf32> to vector<8x16xf32>
    %5 = arith.addf %2, %4 : vector<8x16xf32>
    %cst_5 = arith.constant 0.000000e+00 : f32
    %6 = vector.broadcast %cst_5 : f32 to vector<8x16xf32>
    %7 = arith.maximumf %5, %6 : vector<8x16xf32>
    %c0_6 = arith.constant 0 : index
    %c0_7 = arith.constant 0 : index
    %8 = vector.load %arg4[%c0_6, %c0_7] : memref<2x16xf32, #tpu.memory_space<vmem>>, vector<2x16xf32>
    %cst_8 = arith.constant dense<0.000000e+00> : vector<2x8xf32>
    %9 = tpu.matmul %8, %7, %cst_8 {dimension_numbers = #tpu.dot_dimension_numbers<[1], [1], [0], [0], [0, 0, 1, 0], [], []>} : vector<2x16xf32>, vector<8x16xf32>, vector<2x8xf32> -> vector<2x8xf32>
    %c0_9 = arith.constant 0 : index
    %c0_10 = arith.constant 0 : index
    %10 = vector.load %arg5[%c0_9, %c0_10] : memref<2x1xf32, #tpu.memory_space<vmem>>, vector<2x1xf32>
    %11 = vector.broadcast %10 : vector<2x1xf32> to vector<2x8xf32>
    %12 = arith.addf %9, %11 : vector<2x8xf32>
    %c0_11 = arith.constant 0 : index
    %c0_12 = arith.constant 0 : index
    %13 = vector.load %arg6[%c0_11, %c0_12] : memref<2x8xf32, #tpu.memory_space<vmem>>, vector<2x8xf32>
    tpu.vector_store %arg6[%c0_11, %c0_12], %12 {strides = array<i32>} : memref<2x8xf32, #tpu.memory_space<vmem>>, vector<2x8xf32>,
    return
  }
  func.func @transform_0(%arg0: i32) -> (i32, i32) {
    %c0_i32 = arith.constant 0 : i32
    %c0_i32_0 = arith.constant 0 : i32
    return %arg0, %c0_i32 : i32, i32
  }
  func.func @transform_1(%arg0: i32) -> (i32, i32) {
    %c0_i32 = arith.constant 0 : i32
    %c0_i32_0 = arith.constant 0 : i32
    %c0_i32_1 = arith.constant 0 : i32
    return %c0_i32, %c0_i32_0 : i32, i32
  }
  func.func @transform_2(%arg0: i32) -> (i32, i32) {
    %c0_i32 = arith.constant 0 : i32
    %c0_i32_0 = arith.constant 0 : i32
    %c0_i32_1 = arith.constant 0 : i32
    return %c0_i32, %c0_i32_0 : i32, i32
  }
  func.func @transform_3(%arg0: i32) -> (i32, i32) {
    %c0_i32 = arith.constant 0 : i32
    %c0_i32_0 = arith.constant 0 : i32
    %c0_i32_1 = arith.constant 0 : i32
    return %c0_i32, %c0_i32_0 : i32, i32
  }
  func.func @transform_4(%arg0: i32) -> (i32, i32) {
    %c0_i32 = arith.constant 0 : i32
    %c0_i32_0 = arith.constant 0 : i32
    %c0_i32_1 = arith.constant 0 : i32
    return %c0_i32, %c0_i32_0 : i32, i32
  }
  func.func @transform_5(%arg0: i32) -> (i32, i32) {
    %c0_i32 = arith.constant 0 : i32
    %c0_i32_0 = arith.constant 0 : i32
    return %c0_i32, %arg0 : i32, i32
  }
}

</mosaic_0001>

<llo_original>
// kernel: tpu_custom_call.1
$region0: #{tpu_custom_call.1}
  #allocation0 [shape = 'u32[]', space=smem, size = 0x4, offset = 0x4, fixed_abs, tag = 'smem constant byte address 0x4 - core index']
  #allocation1 [shape = 'u32[72,128]{1,0:T(1,128)}', space=vmem, size = 0x9000, scoped, tag = 'internal scratch']
  %s0 = inlined_call_operand.hbm [shape: f32[8,10], index: 0, kind: input, shape index: {}]
  %s1 = inlined_call_operand.hbm [shape: f32[10,16], index: 1, kind: input, shape index: {}]
  %s2 = inlined_call_operand.vmem [shape: f32[1,16], index: 2, kind: input, shape index: {}]
  %s3 = inlined_call_operand.vmem [shape: f32[2,16], index: 3, kind: input, shape index: {}]
  %s4 = inlined_call_operand.vmem [shape: f32[2,1], index: 4, kind: input, shape index: {}]
  %s5 = inlined_call_operand.hbm [shape: f32[2,8], index: 5, kind: output, shape index: {}]
  %s6 = sld [smem:[#allocation0]]
  $region38: #{tpu_custom_call.1} parent=0
    _
  %s8 = ssub.s32 1, %s6
  %s9 = scalar_select 0, %s8, %s6
  $region1: #{tpu_custom_call.1} parent=0
    #allocation2 [shape = 'u8[4096]{0}', space=vmem, size = 0x1000, scoped, tag = 'input window, operand 0, single buffered']
    #allocation3 [shape = 's32[1]{0}', space=sflag, size = 0x4, scoped, tag = 'scoped memory for tpu_custom_call.1']
    #allocation4 [shape = 's32[1]{0}', space=sflag, size = 0x4, scoped, tag = 'scoped memory for tpu_custom_call.1']
    #allocation5 [shape = 'u8[8192]{0}', space=vmem, size = 0x2000, scoped, tag = 'input window, operand 1, single buffered']
    #allocation6 [shape = 's32[1]{0}', space=sflag, size = 0x4, scoped, tag = 'scoped memory for tpu_custom_call.1']
    #allocation7 [shape = 'u8[1024]{0}', space=vmem, size = 0x400, scoped, tag = 'output window, operand 0, single buffered']
    %10 = vsyncpa [#allocation3], 0
    %11 = vsyncpa [#allocation6], 0
    %12 = vsyncpa [#allocation4], 0
    // Predicated region
    $region2: #{tpu_custom_call.1} parent=1 // pred_check
      _
    $region3: #{tpu_custom_call.1} parent=1 // pred_check_branch
      %14 = sbr.rel (0) target = $region5
    $region4: #{tpu_custom_call.1} parent=1 // pred_region
      %16 = vsyncadd [#allocation3], 0
      %s18 = sshll.u32 %s0, 4
      %s19 = int_to_ptr.hbm [resolvable:$true] %s18
      %s20 = sshll.u32 [#allocation2], 4
      %s21 = int_to_ptr.vmem [resolvable:$true] %s20
      %23 = dma.hbm_to_vmem [thread:$0]  %s19, 128, %s21, [#allocation3]
    $region5: #{tpu_custom_call.1} parent=1 // pred_fallthru
      _
    // Predicated region
    $region6: #{tpu_custom_call.1} parent=1 // pred_check
      _
    $region7: #{tpu_custom_call.1} parent=1 // pred_check_branch
      %25 = sbr.rel (0) target = $region9
    $region8: #{tpu_custom_call.1} parent=1 // pred_region
      %27 = vsyncadd [#allocation6], 0
      %s28 = sshll.u32 %s1, 4
      %s29 = int_to_ptr.hbm [resolvable:$true] %s28
      %s30 = sshll.u32 [#allocation5], 4
      %s31 = int_to_ptr.vmem [resolvable:$true] %s30
      %36 = dma.hbm_to_vmem [thread:$0]  %s29, 256, %s31, [#allocation6], 128, 128, 8
    $region9: #{tpu_custom_call.1} parent=1 // pred_fallthru
      _
    // Predicated region
    $region10: #{tpu_custom_call.1} parent=1 // pred_check
      _
    $region11: #{tpu_custom_call.1} parent=1 // pred_check_branch
      %38 = sbr.rel (0) target = $region13
    $region12: #{tpu_custom_call.1} parent=1 // pred_region
      _
    $region13: #{tpu_custom_call.1} parent=1 // pred_fallthru
      _
    // Predicated region
    $region14: #{tpu_custom_call.1} parent=1 // pred_check
      _
    $region15: #{tpu_custom_call.1} parent=1 // pred_check_branch
      %40 = sbr.rel (0) target = $region17
    $region16: #{tpu_custom_call.1} parent=1 // pred_region
      _
    $region17: #{tpu_custom_call.1} parent=1 // pred_fallthru
      _
    // Predicated region
    $region18: #{tpu_custom_call.1} parent=1 // pred_check
      _
    $region19: #{tpu_custom_call.1} parent=1 // pred_check_branch
      %42 = sbr.rel (0) target = $region21
    $region20: #{tpu_custom_call.1} parent=1 // pred_region
      _
    $region21: #{tpu_custom_call.1} parent=1 // pred_fallthru
      _
    // Predicated region
    $region22: #{tpu_custom_call.1} parent=1 // pred_check
      _
    $region23: #{tpu_custom_call.1} parent=1 // pred_check_branch
      %44 = sbr.rel (0) target = $region25
    $region24: #{tpu_custom_call.1} parent=1 // pred_region
      %46 = dma.done [#allocation3], 128
    $region25: #{tpu_custom_call.1} parent=1 // pred_fallthru
      _
    // Predicated region
    $region26: #{tpu_custom_call.1} parent=1 // pred_check
      _
    $region27: #{tpu_custom_call.1} parent=1 // pred_check_branch
      %48 = sbr.rel (0) target = $region29
    $region28: #{tpu_custom_call.1} parent=1 // pred_region
      %50 = dma.done [#allocation6], 256
    $region29: #{tpu_custom_call.1} parent=1 // pred_fallthru
      _
    %v51 = vld [vmem:[#allocation2] sm:$0xff]
    %v52 = vld [vmem:[#allocation5] sm:$0xff]
    %v53 = vld [vmem:[#allocation5 + $0x8] sm:$0x3]
    %v54 = vld [vmem:[%s2] sm:$0x1]
    %v56 = vperm.slane %v54, 0
    %vm58 = vcmask 80896
    %v60 = vsel %vm58, %v51, 0
    %vm62 = vcmask 1041408
    %v64 = vsel %vm62, %v53, 0
    %66 = vmatpush.msra.mxu0 0.0
    %67 = vmatpush.msra.mxu0 0.0
    %68 = vmatpush.msra.mxu0 0.0
    %69 = vmatpush.msra.mxu0 0.0
    %70 = vmatpush.msra.mxu0 0.0
    %71 = vmatpush.msra.mxu0 0.0
    %72 = vmatpush.msra.mxu0 0.0
    %73 = vmatpush.msra.mxu0 0.0
    %74 = vmatpush.msra.mxu0 0.0
    %75 = vmatpush.msra.mxu0 0.0
    %76 = vmatpush.msra.mxu0 0.0
    %77 = vmatpush.msra.mxu0 0.0
    %78 = vmatpush.msra.mxu0 0.0
    %79 = vmatpush.msra.mxu0 0.0
    %80 = vmatpush.msra.mxu0 %v64
    %81 = vmatpush.msra.mxu0 %v52
    %82 = vmatmul.f32.gmra.mxu0 %v60
    %v83 = vpop.f32.mrf.mxu0
    %v84 = vadd.f32 %v56, %v83
    %85 = vdwg.mxu0
    %v86 = vmax.f32 %v84, 0.0
    %v87 = vld [vmem:[%s3] sm:$0x3]
    %v88 = vld [vmem:[%s4] sm:$0x3]
    %90 = vset.pattern.permute.xlu0 0
    %91 = vperm.xlu0 %90, %v88
    %v92 = vpop.permute.xlu0 %91
    %vm94 = vcmask 130048
    %v96 = vsel %vm94, %v87, 0
    %v99 = vsel %vm94, %v86, 0
    %101 = vmatpush.xpose.msra.mxu0 0.0
    %102 = vmatpush.xpose.msra.mxu0 0.0
    %103 = vmatpush.xpose.msra.mxu0 0.0
    %104 = vmatpush.xpose.msra.mxu0 0.0
    %105 = vmatpush.xpose.msra.mxu0 0.0
    %106 = vmatpush.xpose.msra.mxu0 0.0
    %107 = vmatpush.xpose.msra.mxu0 0.0
    %108 = vmatpush.xpose.msra.mxu0 0.0
    %109 = vmatpush.xpose.msra.mxu0 0.0
    %110 = vmatpush.xpose.msra.mxu0 0.0
    %111 = vmatpush.xpose.msra.mxu0 0.0
    %112 = vmatpush.xpose.msra.mxu0 0.0
    %113 = vmatpush.xpose.msra.mxu0 0.0
    %114 = vmatpush.xpose.msra.mxu0 0.0
    %115 = vmatpush.xpose.msra.mxu0 0.0
    %116 = vmatpush.xpose.msra.mxu0 %v99
    %117 = vmatmul.f32.gmra.mxu0 %v96
    %v118 = vpop.f32.mrf.mxu0
    %v119 = vadd.f32 %v92, %v118
    %120 = vdwg.mxu0
    %vm121 = vcmask 58368
    %122 = vst.msk [vmem:[#allocation7] sm:$0x3] %vm121, %v119
    // Predicated region
    $region30: #{tpu_custom_call.1} parent=1 // pred_check
      _
    $region31: #{tpu_custom_call.1} parent=1 // pred_check_branch
      %124 = sbr.rel (0) target = $region33
    $region32: #{tpu_custom_call.1} parent=1 // pred_region
      %126 = vsyncadd [#allocation4], 0
      %s128 = sshll.u32 [#allocation7], 4
      %s129 = int_to_ptr.vmem [resolvable:$true] %s128
      %s130 = sshll.u32 %s5, 4
      %s131 = int_to_ptr.hbm [resolvable:$true] %s130
      %133 = dma.vmem_to_hbm [thread:$0]  %s129, 32, %s131, [#allocation4]
    $region33: #{tpu_custom_call.1} parent=1 // pred_fallthru
      _
    // Predicated region
    $region34: #{tpu_custom_call.1} parent=1 // pred_check
      _
    $region35: #{tpu_custom_call.1} parent=1 // pred_check_branch
      %135 = sbr.rel (0) target = $region37
    $region36: #{tpu_custom_call.1} parent=1 // pred_region
      %137 = dma.done [#allocation4], 32
    $region37: #{tpu_custom_call.1} parent=1 // pred_fallthru
      _
    %138 = vsyncpa [#allocation3], 1
    %139 = vsyncpa [#allocation6], 1
    %140 = vsyncpa [#allocation4], 1

</llo_original>
